<compile_context>
chip_gen: v7x
topology: tpu7x:2x2x1
jax: 0.10.0
libtpu: 0.0.40
codegen_flags: <defaults>
</compile_context>

<pallas_src>
import functools

import jax
import jax.numpy as jnp
from jax.experimental import pallas as pl
from jax.experimental.pallas import tpu as pltpu

# ---- Module hyper-parameters (consistent with the PyTorch module) ----
GRID_W = 10
GRID_H = 10
NUM_MACHINE_TYPES = 4          # len(machines_definitions)
EMBED_DIM = 10
HIDDEN1 = 128
HIDDEN2 = 64
BATCH = 2
IN_SIZE = GRID_W * GRID_H + EMBED_DIM   # 110

HEAD_PAD = 128                 # padded fused-head output width (10 + 10 + 1 -> 128)
HEAD_W = GRID_W + GRID_H + 1   # 21 real head outputs


def _round_up(x, m):
    return ((x + m - 1) // m) * m


def actor_critic_kernel(x_ref,
                        w1_ref, b1_ref,
                        w2_ref, b2_ref,
                        wh_ref, bh_ref,
                        out_ref):
    x = x_ref[...]                                                     # (TILE_B, 110)

    # shared_features = relu(fc_shared1(x))
    h1 = jnp.dot(x.astype(w1_ref.dtype), w1_ref[...],
                 preferred_element_type=jnp.float32) + b1_ref[...]
    h1 = jnp.maximum(h1, 0.0)                                          # (TILE_B, 128)

    # shared_features = relu(fc_shared2(h1))
    h2 = jnp.dot(h1.astype(w2_ref.dtype), w2_ref[...],
                 preferred_element_type=jnp.float32) + b2_ref[...]
    h2 = jnp.maximum(h2, 0.0)                                          # (TILE_B, 64)

    # Fused heads: one aligned (64 x 128) matmul. Lanes 0:10 = x-logits,
    # 10:20 = y-logits, 20 = critic value, 21:128 = zero padding.
    heads = jnp.dot(h2.astype(wh_ref.dtype), wh_ref[...],
                    preferred_element_type=jnp.float32) + bh_ref[...]  # (TILE_B, 128)

    # (1, 128) lane masks — one vreg of iota/compare work, broadcast over rows.
    lane = jax.lax.broadcasted_iota(jnp.int32, (1, HEAD_PAD), 1)
    mask_x = lane < GRID_W
    mask_y = jnp.logical_and(lane >= GRID_W, lane < GRID_W + GRID_H)
    mask_xy = lane < GRID_W + GRID_H

    neg = jnp.float32(-1e30)

    # Per-head maxima (two masked XLU reductions), merged into one per-lane max,
    # then a SINGLE exp pass over the fused 128-wide tile.
    m_x = jnp.max(jnp.where(mask_x, heads, neg), axis=-1, keepdims=True)   # (TILE_B, 1)
    m_y = jnp.max(jnp.where(mask_y, heads, neg), axis=-1, keepdims=True)   # (TILE_B, 1)
    per_lane_max = jnp.where(mask_x, m_x, m_y)                             # (TILE_B, 128)
    e = jnp.exp(jnp.where(mask_xy, heads - per_lane_max, neg))             # 0 outside 0:20

    s_x = jnp.sum(jnp.where(mask_x, e, 0.0), axis=-1, keepdims=True)
    s_y = jnp.sum(jnp.where(mask_y, e, 0.0), axis=-1, keepdims=True)
    # Exact reciprocal (approx=False) so per-row probabilities sum to 1 within f32 eps.
    inv = jnp.where(mask_x, pl.reciprocal(s_x, approx=False),
                    pl.reciprocal(s_y, approx=False))                     # (TILE_B, 128)

    # Single lane-dense store: probs in lanes 0:20, critic value at lane 20,
    # padded lanes 21:128 stay 0 (padded head weights/bias are zero).
    out_ref[...] = jnp.where(mask_xy, e * inv, heads)


def pack_params(params, compute_dtype=jnp.float32):
    """Fuse the three heads into one zero-padded (64, 128) weight / (1, 128) bias.

    `compute_dtype=jnp.bfloat16` is recommended on v6e/v7x (MXU native rate, halves
    weight DMA); loosen the tolerances in that case.  Biases stay f32 (added after
    the f32-accumulated matmul).
    """
    w1, b1, w2, b2, wx, bx, wy, by, wc, bc = params
    wh = jnp.zeros((HIDDEN2, HEAD_PAD), jnp.float32)
    wh = wh.at[:, :GRID_W].set(wx)
    wh = wh.at[:, GRID_W:GRID_W + GRID_H].set(wy)
    wh = wh.at[:, GRID_W + GRID_H:HEAD_W].set(wc)
    bh = jnp.zeros((1, HEAD_PAD), jnp.float32)
    bh = bh.at[:, :GRID_W].set(bx)
    bh = bh.at[:, GRID_W:GRID_W + GRID_H].set(by)
    bh = bh.at[:, GRID_W + GRID_H:HEAD_W].set(bc)
    return (w1.astype(compute_dtype), b1,
            w2.astype(compute_dtype), b2,
            wh.astype(compute_dtype), bh)


@functools.partial(jax.jit, static_argnames=("tile_b",))
def actor_critic_forward(state, packed_params, tile_b=1024):
    """state: (B, IN_SIZE) float32. packed_params: output of pack_params."""
    w1, b1, w2, b2, wh, bh = packed_params
    B = state.shape[0]
    assert state.shape[1] == IN_SIZE

    # batch tile: multiple of 8 sublanes, capped at tile_b; no host-side padding —
    # the ragged last block is handled by Pallas boundary-block masking.
    tile = min(tile_b, _round_up(B, 8))
    n_tiles = pl.cdiv(B, tile)
    b_rows = n_tiles * tile

    def resident_spec(arr):
        # full-array block, constant index -> stays resident in VMEM across batch tiles
        return pl.BlockSpec(arr.shape, lambda i: (0, 0))

    flops = 2 * b_rows * (IN_SIZE * HIDDEN1 + HIDDEN1 * HIDDEN2 + HIDDEN2 * HEAD_PAD)
    transcendentals = b_rows * HEAD_PAD      # single exp pass per row
    bytes_accessed = 4 * (state.size + b1.size + b2.size + bh.size
                          + B * HEAD_PAD) + w1.dtype.itemsize * (w1.size + w2.size + wh.size)

    out = pl.pallas_call(
        actor_critic_kernel,
        out_shape=jax.ShapeDtypeStruct((B, HEAD_PAD), jnp.float32),
        grid_spec=pltpu.PrefetchScalarGridSpec(
            num_scalar_prefetch=0,
            grid=(n_tiles,),
            in_specs=[
                pl.BlockSpec((tile, IN_SIZE), lambda i: (i, 0)),
                resident_spec(w1), resident_spec(b1),
                resident_spec(w2), resident_spec(b2),
                resident_spec(wh), resident_spec(bh),
            ],
            out_specs=pl.BlockSpec((tile, HEAD_PAD), lambda i: (i, 0)),
        ),
        compiler_params=pltpu.CompilerParams(
            dimension_semantics=("parallel",)),     # v7x: split batch tiles across TCs
        cost_estimate=pl.CostEstimate(
            flops=flops, transcendentals=transcendentals,
            bytes_accessed=bytes_accessed),
    )(state, w1, b1, w2, b2, wh, bh)

    prob_x = out[:, :GRID_W]
    prob_y = out[:, GRID_W:GRID_W + GRID_H]
    state_value = out[:, GRID_W + GRID_H:GRID_W + GRID_H + 1]
    return prob_x, prob_y, state_value


def init_params(key):
    """Deterministic init, PyTorch-Linear-style uniform(+-1/sqrt(fan_in)); (in, out) layout."""
    def linear(k, fan_in, fan_out):
        kw, kb = jax.random.split(k)
        bound = 1.0 / jnp.sqrt(fan_in)
        w = jax.random.uniform(kw, (fan_in, fan_out), jnp.float32, -bound, bound)
        b = jax.random.uniform(kb, (1, fan_out), jnp.float32, -bound, bound)
        return w, b

    k1, k2, k3, k4, k5 = jax.random.split(key, 5)
    w1, b1 = linear(k1, IN_SIZE, HIDDEN1)
    w2, b2 = linear(k2, HIDDEN1, HIDDEN2)
    wx, bx = linear(k3, HIDDEN2, GRID_W)
    wy, by = linear(k4, HIDDEN2, GRID_H)
    wc, bc = linear(k5, HIDDEN2, 1)
    return (w1, b1, w2, b2, wx, bx, wy, by, wc, bc)


def reference_forward(state, params):
    w1, b1, w2, b2, wx, bx, wy, by, wc, bc = params
    h1 = jnp.maximum(state @ w1 + b1, 0.0)
    h2 = jnp.maximum(h1 @ w2 + b2, 0.0)
    px = jax.nn.softmax(h2 @ wx + bx, axis=-1)
    py = jax.nn.softmax(h2 @ wy + by, axis=-1)
    v = h2 @ wc + bc
    return px, py, v


if __name__ == "__main__":
    key = jax.random.PRNGKey(0)
    k_params, k_grid, k_emb = jax.random.split(key, 3)

    params = init_params(k_params)
    packed = pack_params(params)     # pass compute_dtype=jnp.bfloat16 on v6e/v7x

    # Build a small batch of state tensors like get_state_representation would:
    # normalized flattened grid ++ machine embedding row.
    # TODO(synk): for the B~=2 RL-inference path, fuse this embedding lookup /
    # normalize / concat glue into the kernel (scalar-prefetch machine_ids, keep the
    # (4,10) embedding table resident in VMEM) to remove the extra tiny HBM round-trips.
    grid = jax.random.randint(k_grid, (BATCH, GRID_W * GRID_H), 0, NUM_MACHINE_TYPES)
    grid = grid.astype(jnp.float32) / (NUM_MACHINE_TYPES - 1)
    embedding_table = jax.random.normal(k_emb, (NUM_MACHINE_TYPES, EMBED_DIM), jnp.float32)
    machine_ids = jnp.array([1, 3], dtype=jnp.int32)
    machine_emb = embedding_table[machine_ids]          # plain-JAX glue (embedding lookup)
    state_tensor = jnp.concatenate([grid, machine_emb], axis=-1)   # (BATCH, IN_SIZE)

    prob_x, prob_y, state_value = actor_critic_forward(state_tensor, packed)
    jax.block_until_ready((prob_x, prob_y, state_value))

    # sanity check against pure-JAX reference
    ref_px, ref_py, ref_v = reference_forward(state_tensor, params)
    assert prob_x.shape == (BATCH, GRID_W)
    assert prob_y.shape == (BATCH, GRID_H)
    assert state_value.shape == (BATCH, 1)
    assert jnp.allclose(prob_x, ref_px, atol=1e-3), "prob_x mismatch"
    assert jnp.allclose(prob_y, ref_py, atol=1e-3), "prob_y mismatch"
    assert jnp.allclose(state_value, ref_v, atol=1e-3), "state_value mismatch"
    # probabilities normalize (exact reciprocal in-kernel)
    assert jnp.allclose(jnp.sum(prob_x, axis=-1), 1.0, atol=1e-3)
    assert jnp.allclose(jnp.sum(prob_y, axis=-1), 1.0, atol=1e-3)

    print("KERNEL_OK")
</pallas_src>

<mosaic_0001>
module attributes {stable_mosaic.version = 11 : i64} {
  func.func @actor_critic_kernel(%arg0: i32, %arg1: memref<8x110xf32, #tpu.memory_space<vmem>>, %arg2: memref<110x128xf32, #tpu.memory_space<vmem>>, %arg3: memref<1x128xf32, #tpu.memory_space<vmem>>, %arg4: memref<128x64xf32, #tpu.memory_space<vmem>>, %arg5: memref<1x64xf32, #tpu.memory_space<vmem>>, %arg6: memref<64x128xf32, #tpu.memory_space<vmem>>, %arg7: memref<1x128xf32, #tpu.memory_space<vmem>>, %arg8: memref<8x128xf32, #tpu.memory_space<vmem>>) attributes {dimension_semantics = [#tpu.dimension_semantics<parallel>], iteration_bounds = array<i64: 1>, scalar_prefetch = 0 : i64, scratch_operands = 0 : i64, tpu.core_type = #tpu.core_type<tc>, window_params = [{transform_indices = @transform_0, window_bounds = array<i64: 8, 110>}, {pipeline_mode = #tpu.pipeline_mode<synchronous>, transform_indices = @transform_1, window_bounds = array<i64: 110, 128>}, {pipeline_mode = #tpu.pipeline_mode<synchronous>, transform_indices = @transform_2, window_bounds = array<i64: 1, 128>}, {pipeline_mode = #tpu.pipeline_mode<synchronous>, transform_indices = @transform_3, window_bounds = array<i64: 128, 64>}, {pipeline_mode = #tpu.pipeline_mode<synchronous>, transform_indices = @transform_4, window_bounds = array<i64: 1, 64>}, {pipeline_mode = #tpu.pipeline_mode<synchronous>, transform_indices = @transform_5, window_bounds = array<i64: 64, 128>}, {pipeline_mode = #tpu.pipeline_mode<synchronous>, transform_indices = @transform_6, window_bounds = array<i64: 1, 128>}, {transform_indices = @transform_7, window_bounds = array<i64: 8, 128>}]} {
    %c0 = arith.constant 0 : index
    %c0_0 = arith.constant 0 : index
    %0 = vector.load %arg1[%c0, %c0_0] : memref<8x110xf32, #tpu.memory_space<vmem>>, vector<8x110xf32>
    %c0_1 = arith.constant 0 : index
    %c0_2 = arith.constant 0 : index
    %1 = vector.load %arg2[%c0_1, %c0_2] : memref<110x128xf32, #tpu.memory_space<vmem>>, vector<110x128xf32>
    %cst = arith.constant dense<0.000000e+00> : vector<8x128xf32>
    %2 = tpu.matmul %0, %1, %cst {dimension_numbers = #tpu.dot_dimension_numbers<[1], [0], [0], [1], [0, 0, 1, 1], [], []>} : vector<8x110xf32>, vector<110x128xf32>, vector<8x128xf32> -> vector<8x128xf32>
    %c0_3 = arith.constant 0 : index
    %c0_4 = arith.constant 0 : index
    %3 = vector.load %arg3[%c0_3, %c0_4] : memref<1x128xf32, #tpu.memory_space<vmem>>, vector<1x128xf32>
    %4 = vector.broadcast %3 : vector<1x128xf32> to vector<8x128xf32>
    %5 = arith.addf %2, %4 : vector<8x128xf32>
    %cst_5 = arith.constant 0.000000e+00 : f32
    %6 = vector.broadcast %cst_5 : f32 to vector<8x128xf32>
    %7 = arith.maximumf %5, %6 : vector<8x128xf32>
    %c0_6 = arith.constant 0 : index
    %c0_7 = arith.constant 0 : index
    %8 = vector.load %arg4[%c0_6, %c0_7] : memref<128x64xf32, #tpu.memory_space<vmem>>, vector<128x64xf32>
    %cst_8 = arith.constant dense<0.000000e+00> : vector<8x64xf32>
    %9 = tpu.matmul %7, %8, %cst_8 {dimension_numbers = #tpu.dot_dimension_numbers<[1], [0], [0], [1], [0, 0, 1, 1], [], []>} : vector<8x128xf32>, vector<128x64xf32>, vector<8x64xf32> -> vector<8x64xf32>
    %c0_9 = arith.constant 0 : index
    %c0_10 = arith.constant 0 : index
    %10 = vector.load %arg5[%c0_9, %c0_10] : memref<1x64xf32, #tpu.memory_space<vmem>>, vector<1x64xf32>
    %11 = vector.broadcast %10 : vector<1x64xf32> to vector<8x64xf32>
    %12 = arith.addf %9, %11 : vector<8x64xf32>
    %cst_11 = arith.constant 0.000000e+00 : f32
    %13 = vector.broadcast %cst_11 : f32 to vector<8x64xf32>
    %14 = arith.maximumf %12, %13 : vector<8x64xf32>
    %c0_12 = arith.constant 0 : index
    %c0_13 = arith.constant 0 : index
    %15 = vector.load %arg6[%c0_12, %c0_13] : memref<64x128xf32, #tpu.memory_space<vmem>>, vector<64x128xf32>
    %cst_14 = arith.constant dense<0.000000e+00> : vector<8x128xf32>
    %16 = tpu.matmul %14, %15, %cst_14 {dimension_numbers = #tpu.dot_dimension_numbers<[1], [0], [0], [1], [0, 0, 1, 1], [], []>} : vector<8x64xf32>, vector<64x128xf32>, vector<8x128xf32> -> vector<8x128xf32>
    %c0_15 = arith.constant 0 : index
    %c0_16 = arith.constant 0 : index
    %17 = vector.load %arg7[%c0_15, %c0_16] : memref<1x128xf32, #tpu.memory_space<vmem>>, vector<1x128xf32>
    %18 = vector.broadcast %17 : vector<1x128xf32> to vector<8x128xf32>
    %19 = arith.addf %16, %18 : vector<8x128xf32>
    %20 = tpu.iota {dimensions = array<i32: 1>} : vector<1x128xi32>
    %c10_i32 = arith.constant 10 : i32
    %21 = vector.broadcast %c10_i32 : i32 to vector<1x128xi32>
    %22 = arith.cmpi slt, %20, %21 : vector<1x128xi32>
    %c10_i32_17 = arith.constant 10 : i32
    %23 = vector.broadcast %c10_i32_17 : i32 to vector<1x128xi32>
    %24 = arith.cmpi sge, %20, %23 : vector<1x128xi32>
    %c20_i32 = arith.constant 20 : i32
    %25 = vector.broadcast %c20_i32 : i32 to vector<1x128xi32>
    %26 = arith.cmpi slt, %20, %25 : vector<1x128xi32>
    %27 = arith.andi %24, %26 : vector<1x128xi1>
    %c20_i32_18 = arith.constant 20 : i32
    %28 = vector.broadcast %c20_i32_18 : i32 to vector<1x128xi32>
    %29 = arith.cmpi slt, %20, %28 : vector<1x128xi32>
    %cst_19 = arith.constant -1.000000e+30 : f32
    %30 = vector.shape_cast %22 : vector<1x128xi1> to vector<1x128xi1>
    %31 = vector.broadcast %30 : vector<1x128xi1> to vector<8x128xi1>
    %32 = vector.broadcast %cst_19 : f32 to vector<8x128xf32>
    %33 = arith.select %31, %19, %32 : vector<8x128xi1>, vector<8x128xf32>
    %cst_20 = arith.constant dense<0xFF800000> : vector<8xf32>
    %34 = vector.multi_reduction <maximumf>, %33, %cst_20 [1] : vector<8x128xf32> to vector<8xf32>
    %35 = vector.shape_cast %34 : vector<8xf32> to vector<8x1xf32>
    %cst_21 = arith.constant -1.000000e+30 : f32
    %36 = vector.shape_cast %27 : vector<1x128xi1> to vector<1x128xi1>
    %37 = vector.broadcast %36 : vector<1x128xi1> to vector<8x128xi1>
    %38 = vector.broadcast %cst_21 : f32 to vector<8x128xf32>
    %39 = arith.select %37, %19, %38 : vector<8x128xi1>, vector<8x128xf32>
    %cst_22 = arith.constant dense<0xFF800000> : vector<8xf32>
    %40 = vector.multi_reduction <maximumf>, %39, %cst_22 [1] : vector<8x128xf32> to vector<8xf32>
    %41 = vector.shape_cast %40 : vector<8xf32> to vector<8x1xf32>
    %42 = vector.shape_cast %22 : vector<1x128xi1> to vector<1x128xi1>
    %43 = vector.broadcast %42 : vector<1x128xi1> to vector<8x128xi1>
    %44 = vector.shape_cast %35 : vector<8x1xf32> to vector<8x1xf32>
    %45 = vector.broadcast %44 : vector<8x1xf32> to vector<8x128xf32>
    %46 = vector.shape_cast %41 : vector<8x1xf32> to vector<8x1xf32>
    %47 = vector.broadcast %46 : vector<8x1xf32> to vector<8x128xf32>
    %48 = arith.select %43, %45, %47 : vector<8x128xi1>, vector<8x128xf32>
    %49 = arith.subf %19, %48 : vector<8x128xf32>
    %cst_23 = arith.constant -1.000000e+30 : f32
    %50 = vector.shape_cast %29 : vector<1x128xi1> to vector<1x128xi1>
    %51 = vector.broadcast %50 : vector<1x128xi1> to vector<8x128xi1>
    %52 = vector.broadcast %cst_23 : f32 to vector<8x128xf32>
    %53 = arith.select %51, %49, %52 : vector<8x128xi1>, vector<8x128xf32>
    %54 = math.exp %53 : vector<8x128xf32>
    %cst_24 = arith.constant 0.000000e+00 : f32
    %55 = vector.shape_cast %22 : vector<1x128xi1> to vector<1x128xi1>
    %56 = vector.broadcast %55 : vector<1x128xi1> to vector<8x128xi1>
    %57 = vector.broadcast %cst_24 : f32 to vector<8x128xf32>
    %58 = arith.select %56, %54, %57 : vector<8x128xi1>, vector<8x128xf32>
    %cst_25 = arith.constant dense<0.000000e+00> : vector<8xf32>
    %59 = vector.multi_reduction <add>, %58, %cst_25 [1] : vector<8x128xf32> to vector<8xf32>
    %60 = vector.shape_cast %59 : vector<8xf32> to vector<8x1xf32>
    %cst_26 = arith.constant 0.000000e+00 : f32
    %61 = vector.shape_cast %27 : vector<1x128xi1> to vector<1x128xi1>
    %62 = vector.broadcast %61 : vector<1x128xi1> to vector<8x128xi1>
    %63 = vector.broadcast %cst_26 : f32 to vector<8x128xf32>
    %64 = arith.select %62, %54, %63 : vector<8x128xi1>, vector<8x128xf32>
    %cst_27 = arith.constant dense<0.000000e+00> : vector<8xf32>
    %65 = vector.multi_reduction <add>, %64, %cst_27 [1] : vector<8x128xf32> to vector<8xf32>
    %66 = vector.shape_cast %65 : vector<8xf32> to vector<8x1xf32>
    %67 = tpu.reciprocal %60 : vector<8x1xf32> -> vector<8x1xf32>
    %68 = tpu.reciprocal %66 : vector<8x1xf32> -> vector<8x1xf32>
    %69 = vector.shape_cast %22 : vector<1x128xi1> to vector<1x128xi1>
    %70 = vector.broadcast %69 : vector<1x128xi1> to vector<8x128xi1>
    %71 = vector.shape_cast %67 : vector<8x1xf32> to vector<8x1xf32>
    %72 = vector.broadcast %71 : vector<8x1xf32> to vector<8x128xf32>
    %73 = vector.shape_cast %68 : vector<8x1xf32> to vector<8x1xf32>
    %74 = vector.broadcast %73 : vector<8x1xf32> to vector<8x128xf32>
    %75 = arith.select %70, %72, %74 : vector<8x128xi1>, vector<8x128xf32>
    %76 = arith.mulf %54, %75 : vector<8x128xf32>
    %77 = vector.shape_cast %29 : vector<1x128xi1> to vector<1x128xi1>
    %78 = vector.broadcast %77 : vector<1x128xi1> to vector<8x128xi1>
    %79 = arith.select %78, %76, %19 : vector<8x128xi1>, vector<8x128xf32>
    %c0_28 = arith.constant 0 : index
    %c0_29 = arith.constant 0 : index
    %80 = vector.load %arg8[%c0_28, %c0_29] : memref<8x128xf32, #tpu.memory_space<vmem>>, vector<8x128xf32>
    tpu.vector_store %arg8[%c0_28, %c0_29], %79 {strides = array<i32>} : memref<8x128xf32, #tpu.memory_space<vmem>>, vector<8x128xf32>,
    return
  }
  func.func @transform_0(%arg0: i32) -> (i32, i32) {
    %c0_i32 = arith.constant 0 : i32
    %c0_i32_0 = arith.constant 0 : i32
    return %arg0, %c0_i32 : i32, i32
  }
  func.func @transform_1(%arg0: i32) -> (i32, i32) {
    %c0_i32 = arith.constant 0 : i32
    %c0_i32_0 = arith.constant 0 : i32
    %c0_i32_1 = arith.constant 0 : i32
    return %c0_i32, %c0_i32_0 : i32, i32
  }
  func.func @transform_2(%arg0: i32) -> (i32, i32) {
    %c0_i32 = arith.constant 0 : i32
    %c0_i32_0 = arith.constant 0 : i32
    %c0_i32_1 = arith.constant 0 : i32
    return %c0_i32, %c0_i32_0 : i32, i32
  }
  func.func @transform_3(%arg0: i32) -> (i32, i32) {
    %c0_i32 = arith.constant 0 : i32
    %c0_i32_0 = arith.constant 0 : i32
    %c0_i32_1 = arith.constant 0 : i32
    return %c0_i32, %c0_i32_0 : i32, i32
  }
  func.func @transform_4(%arg0: i32) -> (i32, i32) {
    %c0_i32 = arith.constant 0 : i32
    %c0_i32_0 = arith.constant 0 : i32
    %c0_i32_1 = arith.constant 0 : i32
    return %c0_i32, %c0_i32_0 : i32, i32
  }
  func.func @transform_5(%arg0: i32) -> (i32, i32) {
    %c0_i32 = arith.constant 0 : i32
    %c0_i32_0 = arith.constant 0 : i32
    %c0_i32_1 = arith.constant 0 : i32
    return %c0_i32, %c0_i32_0 : i32, i32
  }
  func.func @transform_6(%arg0: i32) -> (i32, i32) {
    %c0_i32 = arith.constant 0 : i32
    %c0_i32_0 = arith.constant 0 : i32
    %c0_i32_1 = arith.constant 0 : i32
    return %c0_i32, %c0_i32_0 : i32, i32
  }
  func.func @transform_7(%arg0: i32) -> (i32, i32) {
    %c0_i32 = arith.constant 0 : i32
    %c0_i32_0 = arith.constant 0 : i32
    return %arg0, %c0_i32 : i32, i32
  }
}

</mosaic_0001>

<llo_original>
// kernel: actor_critic_forward.1
$region0: #{actor_critic_forward.1}
  #allocation0 [shape = 'u32[]', space=smem, size = 0x4, offset = 0x4, fixed_abs, tag = 'smem constant byte address 0x4 - core index']
  #allocation1 [shape = 'u32[144,128]{1,0:T(1,128)}', space=vmem, size = 0x12000, scoped, tag = 'internal scratch']
  %s0 = inlined_call_operand.vmem [shape: f32[2,110], index: 0, kind: input, shape index: {}]
  %s1 = inlined_call_operand.vmem [shape: f32[110,128], index: 1, kind: input, shape index: {}]
  %s2 = inlined_call_operand.vmem [shape: f32[1,128], index: 2, kind: input, shape index: {}]
  %s3 = inlined_call_operand.vmem [shape: f32[128,64], index: 3, kind: input, shape index: {}]
  %s4 = inlined_call_operand.vmem [shape: f32[1,64], index: 4, kind: input, shape index: {}]
  %s5 = inlined_call_operand.vmem [shape: f32[64,128], index: 5, kind: input, shape index: {}]
  %s6 = inlined_call_operand.vmem [shape: f32[1,128], index: 6, kind: input, shape index: {}]
  %s7 = inlined_call_operand.vmem [shape: f32[2,128], index: 7, kind: output, shape index: {}]
  %s8 = sld [smem:[#allocation0]]
  $region68: #{actor_critic_forward.1} parent=0
    _
  %s10 = ssub.s32 1, %s8
  %s11 = scalar_select 0, %s10, %s8
  $region1: #{actor_critic_forward.1} parent=0
    #allocation2 [shape = 'u8[4096]{0}', space=vmem, size = 0x1000, scoped, tag = 'output window, operand 0, single buffered']
    // Predicated region
    $region2: #{actor_critic_forward.1} parent=1 // pred_check
      _
    $region3: #{actor_critic_forward.1} parent=1 // pred_check_branch
      %13 = sbr.rel (0) target = $region5
    $region4: #{actor_critic_forward.1} parent=1 // pred_region
      _
    $region5: #{actor_critic_forward.1} parent=1 // pred_fallthru
      _
    // Predicated region
    $region6: #{actor_critic_forward.1} parent=1 // pred_check
      _
    $region7: #{actor_critic_forward.1} parent=1 // pred_check_branch
      %15 = sbr.rel (0) target = $region9
    $region8: #{actor_critic_forward.1} parent=1 // pred_region
      _
    $region9: #{actor_critic_forward.1} parent=1 // pred_fallthru
      _
    // Predicated region
    $region10: #{actor_critic_forward.1} parent=1 // pred_check
      _
    $region11: #{actor_critic_forward.1} parent=1 // pred_check_branch
      %17 = sbr.rel (0) target = $region13
    $region12: #{actor_critic_forward.1} parent=1 // pred_region
      _
    $region13: #{actor_critic_forward.1} parent=1 // pred_fallthru
      _
    // Predicated region
    $region14: #{actor_critic_forward.1} parent=1 // pred_check
      _
    $region15: #{actor_critic_forward.1} parent=1 // pred_check_branch
      %19 = sbr.rel (0) target = $region17
    $region16: #{actor_critic_forward.1} parent=1 // pred_region
      _
    $region17: #{actor_critic_forward.1} parent=1 // pred_fallthru
      _
    // Predicated region
    $region18: #{actor_critic_forward.1} parent=1 // pred_check
      _
    $region19: #{actor_critic_forward.1} parent=1 // pred_check_branch
      %21 = sbr.rel (0) target = $region21
    $region20: #{actor_critic_forward.1} parent=1 // pred_region
      _
    $region21: #{actor_critic_forward.1} parent=1 // pred_fallthru
      _
    // Predicated region
    $region22: #{actor_critic_forward.1} parent=1 // pred_check
      _
    $region23: #{actor_critic_forward.1} parent=1 // pred_check_branch
      %23 = sbr.rel (0) target = $region25
    $region24: #{actor_critic_forward.1} parent=1 // pred_region
      _
    $region25: #{actor_critic_forward.1} parent=1 // pred_fallthru
      _
    // Predicated region
    $region26: #{actor_critic_forward.1} parent=1 // pred_check
      _
    $region27: #{actor_critic_forward.1} parent=1 // pred_check_branch
      %25 = sbr.rel (0) target = $region29
    $region28: #{actor_critic_forward.1} parent=1 // pred_region
      _
    $region29: #{actor_critic_forward.1} parent=1 // pred_fallthru
      _
    %v26 = vld [vmem:[%s0] sm:$0xff]
    %v27 = vld [vmem:[%s1] sm:$0xff]
    %v28 = vld [vmem:[%s1 + $0x8] sm:$0xff]
    %v29 = vld [vmem:[%s1 + $0x10] sm:$0xff]
    %v30 = vld [vmem:[%s1 + $0x18] sm:$0xff]
    %v31 = vld [vmem:[%s1 + $0x20] sm:$0xff]
    %v32 = vld [vmem:[%s1 + $0x28] sm:$0xff]
    %v33 = vld [vmem:[%s1 + $0x30] sm:$0xff]
    %v34 = vld [vmem:[%s1 + $0x38] sm:$0xff]
    %v35 = vld [vmem:[%s1 + $0x40] sm:$0xff]
    %v36 = vld [vmem:[%s1 + $0x48] sm:$0xff]
    %v37 = vld [vmem:[%s1 + $0x50] sm:$0xff]
    %v38 = vld [vmem:[%s1 + $0x58] sm:$0xff]
    %v39 = vld [vmem:[%s1 + $0x60] sm:$0xff]
    %v40 = vld [vmem:[%s1 + $0x68] sm:$0x3f]
    %v41 = vld [vmem:[%s2] sm:$0x1]
    %v43 = vlaneseq
    %v44 = vshrl.u32 %v43, 7
    %v45 = vsub.s32 0, %v44
    %v46 = vrot.slane %v41, %v45
    %vm48 = vcmask 900096
    %v50 = vsel %vm48, %v26, 0
    %vm52 = vcmask 1045504
    %v54 = vsel %vm52, %v40, 0
    %56 = vmatprep.subr.mxu0 0.0
    %57 = vmatpush1.msra.mxu0 %v27
    %58 = vmatprep.subr.mxu0 0.0
    %59 = vmatpush1.msra.mxu0 %v28
    %60 = vmatprep.subr.mxu0 0.0
    %61 = vmatpush1.msra.mxu0 %v29
    %62 = vmatprep.subr.mxu0 0.0
    %63 = vmatpush1.msra.mxu0 %v30
    %64 = vmatprep.subr.mxu0 0.0
    %65 = vmatpush1.msra.mxu0 %v31
    %66 = vmatprep.subr.mxu0 0.0
    %67 = vmatpush1.msra.mxu0 %v32
    %68 = vmatprep.subr.mxu0 0.0
    %69 = vmatpush1.msra.mxu0 %v33
    %70 = vmatprep.subr.mxu0 0.0
    %71 = vmatpush1.msra.mxu0 %v34
    %72 = vmatprep.subr.mxu0 0.0
    %73 = vmatpush1.msra.mxu0 %v35
    %74 = vmatprep.subr.mxu0 0.0
    %75 = vmatpush1.msra.mxu0 %v36
    %76 = vmatprep.subr.mxu0 0.0
    %77 = vmatpush1.msra.mxu0 %v37
    %78 = vmatprep.subr.mxu0 0.0
    %79 = vmatpush1.msra.mxu0 %v38
    %80 = vmatprep.subr.mxu0 0.0
    %81 = vmatpush1.msra.mxu0 %v39
    %82 = vmatprep.subr.mxu0 0.0
    %83 = vmatpush1.msra.mxu0 %v54
    %84 = vmatprep.subr.mxu0 0.0
    %85 = vmatpush1.msra.mxu0 0.0
    %86 = vmatprep.subr.mxu0 0.0
    %87 = vmatpush1.msra.mxu0 0.0
    %88 = vmatprep.subr.mxu0 0.0
    %89 = vmatpush1.msra.mxu0 0.0
    %90 = vmatprep.subr.mxu0 0.0
    %91 = vmatpush1.msra.mxu0 0.0
    %92 = vmatprep.subr.mxu0 0.0
    %93 = vmatpush1.msra.mxu0 0.0
    %94 = vmatprep.subr.mxu0 0.0
    %95 = vmatpush1.msra.mxu0 0.0
    %96 = vmatprep.subr.mxu0 0.0
    %97 = vmatpush1.msra.mxu0 0.0
    %98 = vmatprep.subr.mxu0 0.0
    %99 = vmatpush1.msra.mxu0 0.0
    %100 = vmatprep.subr.mxu0 0.0
    %101 = vmatpush1.msra.mxu0 0.0
    %102 = vmatprep.subr.mxu0 0.0
    %103 = vmatpush1.msra.mxu0 0.0
    %104 = vmatprep.subr.mxu0 0.0
    %105 = vmatpush1.msra.mxu0 0.0
    %106 = vmatprep.subr.mxu0 0.0
    %107 = vmatpush1.msra.mxu0 0.0
    %108 = vmatprep.subr.mxu0 0.0
    %109 = vmatpush1.msra.mxu0 0.0
    %110 = vmatprep.subr.mxu0 0.0
    %111 = vmatpush1.msra.mxu0 0.0
    %112 = vmatprep.subr.mxu0 0.0
    %113 = vmatpush1.msra.mxu0 0.0
    %114 = vmatprep.subr.mxu0 0.0
    %115 = vmatpush1.msra.mxu0 0.0
    %116 = vmatprep.subr.mxu0 0.0
    %117 = vmatpush1.msra.mxu0 0.0
    %118 = vmatprep.subr.mxu0 0.0
    %119 = vmatpush1.msra.mxu0 0.0
    %120 = vmatprep.mubr.f32.mxu0 0.0
    %121 = vmatmul.mubr.f32.gmra.mrb[0].mxu0 %v50
    %v122 = vpop.f32.mrb[0].mxu0
    %v123 = vadd.f32 %v46, %v122
    %v124 = vpop.f32.mrb[0].mxu0
    %125 = vdwg.mxu0
    %v126 = vmax.f32 %v123, 0.0
    %v127 = vld [vmem:[%s3] sm:$0xff]
    %v128 = vld [vmem:[%s3 + $0x8] sm:$0xff]
    %v129 = vld [vmem:[%s3 + $0x10] sm:$0xff]
    %v130 = vld [vmem:[%s3 + $0x18] sm:$0xff]
    %v131 = vld [vmem:[%s3 + $0x20] sm:$0xff]
    %v132 = vld [vmem:[%s3 + $0x28] sm:$0xff]
    %v133 = vld [vmem:[%s3 + $0x30] sm:$0xff]
    %v134 = vld [vmem:[%s3 + $0x38] sm:$0xff]
    %v135 = vld [vmem:[%s3 + $0x40] sm:$0xff]
    %v136 = vld [vmem:[%s3 + $0x48] sm:$0xff]
    %v137 = vld [vmem:[%s3 + $0x50] sm:$0xff]
    %v138 = vld [vmem:[%s3 + $0x58] sm:$0xff]
    %v139 = vld [vmem:[%s3 + $0x60] sm:$0xff]
    %v140 = vld [vmem:[%s3 + $0x68] sm:$0xff]
    %v141 = vld [vmem:[%s3 + $0x70] sm:$0xff]
    %v142 = vld [vmem:[%s3 + $0x78] sm:$0xff]
    %v143 = vld [vmem:[%s4] sm:$0x1]
    %v145 = vlaneseq
    %v146 = vshrl.u32 %v145, 7
    %v147 = vsub.s32 0, %v146
    %v148 = vrot.slane %v143, %v147
    %150 = vmatprep.subr.mxu0 0.0
    %151 = vmatpush1.msra.mxu0 %v127
    %152 = vmatprep.subr.mxu0 0.0
    %153 = vmatpush1.msra.mxu0 %v128
    %154 = vmatprep.subr.mxu0 0.0
    %155 = vmatpush1.msra.mxu0 %v129
    %156 = vmatprep.subr.mxu0 0.0
    %157 = vmatpush1.msra.mxu0 %v130
    %158 = vmatprep.subr.mxu0 0.0
    %159 = vmatpush1.msra.mxu0 %v131
    %160 = vmatprep.subr.mxu0 0.0
    %161 = vmatpush1.msra.mxu0 %v132
    %162 = vmatprep.subr.mxu0 0.0
    %163 = vmatpush1.msra.mxu0 %v133
    %164 = vmatprep.subr.mxu0 0.0
    %165 = vmatpush1.msra.mxu0 %v134
    %166 = vmatprep.subr.mxu0 0.0
    %167 = vmatpush1.msra.mxu0 %v135
    %168 = vmatprep.subr.mxu0 0.0
    %169 = vmatpush1.msra.mxu0 %v136
    %170 = vmatprep.subr.mxu0 0.0
    %171 = vmatpush1.msra.mxu0 %v137
    %172 = vmatprep.subr.mxu0 0.0
    %173 = vmatpush1.msra.mxu0 %v138
    %174 = vmatprep.subr.mxu0 0.0
    %175 = vmatpush1.msra.mxu0 %v139
    %176 = vmatprep.subr.mxu0 0.0
    %177 = vmatpush1.msra.mxu0 %v140
    %178 = vmatprep.subr.mxu0 0.0
    %179 = vmatpush1.msra.mxu0 %v141
    %180 = vmatprep.subr.mxu0 0.0
    %181 = vmatpush1.msra.mxu0 %v142
    %182 = vmatprep.subr.mxu0 0.0
    %183 = vmatpush1.msra.mxu0 0.0
    %184 = vmatprep.subr.mxu0 0.0
    %185 = vmatpush1.msra.mxu0 0.0
    %186 = vmatprep.subr.mxu0 0.0
    %187 = vmatpush1.msra.mxu0 0.0
    %188 = vmatprep.subr.mxu0 0.0
    %189 = vmatpush1.msra.mxu0 0.0
    %190 = vmatprep.subr.mxu0 0.0
    %191 = vmatpush1.msra.mxu0 0.0
    %192 = vmatprep.subr.mxu0 0.0
    %193 = vmatpush1.msra.mxu0 0.0
    %194 = vmatprep.subr.mxu0 0.0
    %195 = vmatpush1.msra.mxu0 0.0
    %196 = vmatprep.subr.mxu0 0.0
    %197 = vmatpush1.msra.mxu0 0.0
    %198 = vmatprep.subr.mxu0 0.0
    %199 = vmatpush1.msra.mxu0 0.0
    %200 = vmatprep.subr.mxu0 0.0
    %201 = vmatpush1.msra.mxu0 0.0
    %202 = vmatprep.subr.mxu0 0.0
    %203 = vmatpush1.msra.mxu0 0.0
    %204 = vmatprep.subr.mxu0 0.0
    %205 = vmatpush1.msra.mxu0 0.0
    %206 = vmatprep.subr.mxu0 0.0
    %207 = vmatpush1.msra.mxu0 0.0
    %208 = vmatprep.subr.mxu0 0.0
    %209 = vmatpush1.msra.mxu0 0.0
    %210 = vmatprep.subr.mxu0 0.0
    %211 = vmatpush1.msra.mxu0 0.0
    %212 = vmatprep.subr.mxu0 0.0
    %213 = vmatpush1.msra.mxu0 0.0
    %214 = vmatprep.mubr.f32.mxu0 0.0
    %215 = vmatmul.mubr.f32.gmra.mrb[0].mxu0 %v126
    %v216 = vpop.f32.mrb[0].mxu0
    %v217 = vadd.f32 %v148, %v216
    %v218 = vpop.f32.mrb[0].mxu0
    %219 = vdwg.mxu0
    %v220 = vmax.f32 %v217, 0.0
    %v221 = vld [vmem:[%s5] sm:$0xff]
    %v222 = vld [vmem:[%s5 + $0x8] sm:$0xff]
    %v223 = vld [vmem:[%s5 + $0x10] sm:$0xff]
    %v224 = vld [vmem:[%s5 + $0x18] sm:$0xff]
    %v225 = vld [vmem:[%s5 + $0x20] sm:$0xff]
    %v226 = vld [vmem:[%s5 + $0x28] sm:$0xff]
    %v227 = vld [vmem:[%s5 + $0x30] sm:$0xff]
    %v228 = vld [vmem:[%s5 + $0x38] sm:$0xff]
    %v229 = vld [vmem:[%s6] sm:$0x1]
    %v231 = vlaneseq
    %v232 = vshrl.u32 %v231, 7
    %v233 = vsub.s32 0, %v232
    %v234 = vrot.slane %v229, %v233
    %vm236 = vcmask 523264
    %v238 = vsel %vm236, %v220, 0
    %240 = vmatprep.subr.mxu0 0.0
    %241 = vmatpush1.msra.mxu0 %v221
    %242 = vmatprep.subr.mxu0 0.0
    %243 = vmatpush1.msra.mxu0 %v222
    %244 = vmatprep.subr.mxu0 0.0
    %245 = vmatpush1.msra.mxu0 %v223
    %246 = vmatprep.subr.mxu0 0.0
    %247 = vmatpush1.msra.mxu0 %v224
    %248 = vmatprep.subr.mxu0 0.0
    %249 = vmatpush1.msra.mxu0 %v225
    %250 = vmatprep.subr.mxu0 0.0
    %251 = vmatpush1.msra.mxu0 %v226
    %252 = vmatprep.subr.mxu0 0.0
    %253 = vmatpush1.msra.mxu0 %v227
    %254 = vmatprep.subr.mxu0 0.0
    %255 = vmatpush1.msra.mxu0 %v228
    %256 = vmatprep.subr.mxu0 0.0
    %257 = vmatpush1.msra.mxu0 0.0
    %258 = vmatprep.subr.mxu0 0.0
    %259 = vmatpush1.msra.mxu0 0.0
    %260 = vmatprep.subr.mxu0 0.0
    %261 = vmatpush1.msra.mxu0 0.0
    %262 = vmatprep.subr.mxu0 0.0
    %263 = vmatpush1.msra.mxu0 0.0
    %264 = vmatprep.subr.mxu0 0.0
    %265 = vmatpush1.msra.mxu0 0.0
    %266 = vmatprep.subr.mxu0 0.0
    %267 = vmatpush1.msra.mxu0 0.0
    %268 = vmatprep.subr.mxu0 0.0
    %269 = vmatpush1.msra.mxu0 0.0
    %270 = vmatprep.subr.mxu0 0.0
    %271 = vmatpush1.msra.mxu0 0.0
    %272 = vmatprep.subr.mxu0 0.0
    %273 = vmatpush1.msra.mxu0 0.0
    %274 = vmatprep.subr.mxu0 0.0
    %275 = vmatpush1.msra.mxu0 0.0
    %276 = vmatprep.subr.mxu0 0.0
    %277 = vmatpush1.msra.mxu0 0.0
    %278 = vmatprep.subr.mxu0 0.0
    %279 = vmatpush1.msra.mxu0 0.0
    %280 = vmatprep.subr.mxu0 0.0
    %281 = vmatpush1.msra.mxu0 0.0
    %282 = vmatprep.subr.mxu0 0.0
    %283 = vmatpush1.msra.mxu0 0.0
    %284 = vmatprep.subr.mxu0 0.0
    %285 = vmatpush1.msra.mxu0 0.0
    %286 = vmatprep.subr.mxu0 0.0
    %287 = vmatpush1.msra.mxu0 0.0
    %288 = vmatprep.subr.mxu0 0.0
    %289 = vmatpush1.msra.mxu0 0.0
    %290 = vmatprep.subr.mxu0 0.0
    %291 = vmatpush1.msra.mxu0 0.0
    %292 = vmatprep.subr.mxu0 0.0
    %293 = vmatpush1.msra.mxu0 0.0
    %294 = vmatprep.subr.mxu0 0.0
    %295 = vmatpush1.msra.mxu0 0.0
    %296 = vmatprep.subr.mxu0 0.0
    %297 = vmatpush1.msra.mxu0 0.0
    %298 = vmatprep.subr.mxu0 0.0
    %299 = vmatpush1.msra.mxu0 0.0
    %300 = vmatprep.subr.mxu0 0.0
    %301 = vmatpush1.msra.mxu0 0.0
    %302 = vmatprep.subr.mxu0 0.0
    %303 = vmatpush1.msra.mxu0 0.0
    %304 = vmatprep.mubr.f32.mxu0 0.0
    %305 = vmatmul.mubr.f32.gmra.mrb[0].mxu0 %v238
    %v306 = vpop.f32.mrb[0].mxu0
    %v307 = vadd.f32 %v234, %v306
    %v308 = vpop.f32.mrb[0].mxu0
    %309 = vdwg.mxu0
    %v310 = vlaneseq
    %v311 = vand.u32 %v310, 127
    %vm312 = vcmp.lt.s32.totalorder %v311, 10
    %vm313 = vcmp.ge.s32.totalorder %v311, 10
    %vm314 = vcmp.lt.s32.totalorder %v311, 20
    %vm315 = vmand %vm313, %vm314
    %v316 = vsel %vm312, 1, 0
    %vm317 = vcmp.eq.s32.totalorder %v316, 1
    %v318 = vsel %vm317, %v307, -1e+30
    %319 = vmax.xlane.f32.xlu0 %v318
    %v320 = vpop.xlane.xlu0 %319
    %v321 = vsel %vm315, 1, 0
    %vm322 = vcmp.eq.s32.totalorder %v321, 1
    %v323 = vsel %vm322, %v307, -1e+30
    %324 = vmax.xlane.f32.xlu0 %v323
    %v325 = vpop.xlane.xlu0 %324
    %v326 = vsel %vm317, %v320, %v325
    %v327 = vsub.f32 %v307, %v326
    %v328 = vsel %vm314, 1, 0
    %vm329 = vcmp.eq.s32.totalorder %v328, 1
    %v330 = vsel %vm329, %v327, -1e+30
    %v331 = vmul.f32 %v330, 1.442695
    %v332 = vpow.pop %v331
    %v333 = vsel %vm317, %v332, 0.0
    %334 = vadd.xlane.f32.xlu0 %v333
    %v335 = vpop.xlane.xlu0 %334
    %v336 = vsel %vm322, %v332, 0.0
    %337 = vadd.xlane.f32.xlu0 %v336
    %v338 = vpop.xlane.xlu0 %337
    %v339 = vrcp.pop %v335
    %v340 = vrcp.pop %v338
    %v341 = vsel %vm317, %v339, %v340
    %v342 = vmul.f32 %v332, %v341
    %v343 = vsel %vm329, %v342, %v307
    %344 = vst [vmem:[#allocation2] sm:$0xff] %v343
    // Predicated region
    $region30: #{actor_critic_forward.1} parent=1 // pred_check
      _
    $region31: #{actor_critic_forward.1} parent=1 // pred_check_branch
      %346 = sbr.rel (0) target = $region33
    $region32: #{actor_critic_forward.1} parent=1 // pred_region
      // Predicated region
      $region34: #{actor_critic_forward.1} parent=32 // pred_check
        _
      $region35: #{actor_critic_forward.1} parent=32 // pred_check_branch
        %348 = sbr.rel (0) target = $region37
      $region36: #{actor_critic_forward.1} parent=32 // pred_region
        // Predicated region
        $region38: #{actor_critic_forward.1} parent=36 // pred_check
          _
        $region39: #{actor_critic_forward.1} parent=36 // pred_check_branch
          %350 = sbr.rel target = $region41
        $region40: #{actor_critic_forward.1} parent=36 // pred_region
          // Predicated region
          $region53: #{actor_critic_forward.1} parent=40 // pred_check
            _
          $region54: #{actor_critic_forward.1} parent=40 // pred_check_branch
            %365 = sbr.rel (0) target = $region56
          $region55: #{actor_critic_forward.1} parent=40 // pred_region
            loop: start=0, step=1, limit=1
            $region57: #{actor_critic_forward.1} parent=55 // loop_pre_header
              _
            $region58: #{actor_critic_forward.1} parent=55 // loop_header
              %s368 = sphi 0, %s372
              %p369 = scmp.ge.s32.totalorder %s368, 1
              %s373 = sphi [#allocation2], [#allocation2]
              %s374 = sphi %s7, %s7
            $region59: #{actor_critic_forward.1} parent=55 // loop_header_branch
              %371 = sbr.rel (%p369) target = $region63
            $region60: #{actor_critic_forward.1} parent=55 // loop_body
              %v375 = vld [vmem:[%s373] sm:$0x3]
              %376 = vst [vmem:[%s374] sm:$0x3] %v375
            $region61: #{actor_critic_forward.1} parent=55 // loop_footer
              %s372 = sadd.s32 1, %s368
            $region62: #{actor_critic_forward.1} parent=55 // loop_footer_branch
              %367 = sbr.rel target = $region58
            $region63: #{actor_critic_forward.1} parent=55 // loop_exit
              _
          $region56: #{actor_critic_forward.1} parent=40 // pred_fallthru
            _
        $region41: #{actor_critic_forward.1} parent=36 // pred_fallthru
          _
        // Predicated region
        $region42: #{actor_critic_forward.1} parent=36 // pred_check
          _
        $region43: #{actor_critic_forward.1} parent=36 // pred_check_branch
          %352 = sbr.rel (0) target = $region45
        $region44: #{actor_critic_forward.1} parent=36 // pred_region
          loop: start=0, step=1, limit=1
          $region46: #{actor_critic_forward.1} parent=44 // loop_pre_header
            _
          $region47: #{actor_critic_forward.1} parent=44 // loop_header
            %s355 = sphi 0, %s359
            %p356 = scmp.ge.s32.totalorder %s355, 1
            %s360 = sphi [#allocation2], [#allocation2]
            %s361 = sphi %s7, %s7
          $region48: #{actor_critic_forward.1} parent=44 // loop_header_branch
            %358 = sbr.rel (%p356) target = $region52
          $region49: #{actor_critic_forward.1} parent=44 // loop_body
            %v362 = vld [vmem:[%s360] sm:$0x3]
            %363 = vst [vmem:[%s361] sm:$0x3] %v362
          $region50: #{actor_critic_forward.1} parent=44 // loop_footer
            %s359 = sadd.s32 1, %s355
          $region51: #{actor_critic_forward.1} parent=44 // loop_footer_branch
            %354 = sbr.rel target = $region47
          $region52: #{actor_critic_forward.1} parent=44 // loop_exit
            _
        $region45: #{actor_critic_forward.1} parent=36 // pred_fallthru
          _
      $region37: #{actor_critic_forward.1} parent=32 // pred_fallthru
        _
      %377 = vnop
    $region33: #{actor_critic_forward.1} parent=1 // pred_fallthru
      _
    // Predicated region
    $region64: #{actor_critic_forward.1} parent=1 // pred_check
      _
    $region65: #{actor_critic_forward.1} parent=1 // pred_check_branch
      %379 = sbr.rel (0) target = $region67
    $region66: #{actor_critic_forward.1} parent=1 // pred_region
      _
    $region67: #{actor_critic_forward.1} parent=1 // pred_fallthru
      _

</llo_original>
